<compile_context>
chip_gen: v7x
topology: tpu7x:2x2x1
jax: 0.10.0
libtpu: 0.0.40
codegen_flags: <defaults>
</compile_context>

<pallas_src>
import math

import jax
import jax.numpy as jnp
from jax.experimental import pallas as pl
from jax.experimental.pallas import tpu as pltpu


def _triple(v):
    if isinstance(v, (tuple, list)):
        assert len(v) == 3
        return tuple(int(x) for x in v)
    return (int(v),) * 3


def _round_up(a, m):
    return (a + m - 1) // m * m


def _matmul_bias_elu_kernel(p_ref, w_ref, b_ref, o_ref):
    # p_ref: (TM, K)      bf16 im2col patch rows
    # w_ref: (K, Cout_p)  bf16 pre-packed weights (VMEM-resident across the grid)
    # b_ref: (1, Cout_p)  f32 bias
    # o_ref: (TM, Cout_p) f32 lane-dense output tile
    acc = jnp.dot(p_ref[...], w_ref[...], preferred_element_type=jnp.float32)
    acc = acc + b_ref[...]                                   # f32 bias add (VPU)
    # ELU (alpha = 1.0).  min() keeps exp() finite on the unselected branch.
    neg = jnp.exp(jnp.minimum(acc, 0.0)) - 1.0
    o_ref[...] = jnp.where(acc > 0, acc, neg).astype(o_ref.dtype)


def conv_block_3d(x, w, b, stride=(1, 1, 1), padding=(1, 1, 1),
                  compute_dtype=jnp.bfloat16, tile_m=256):
    """ConvBlock3D forward: Conv3d(stride, padding) followed by ELU.

    x: (B, Cin, D, H, W)  (PyTorch NCDHW)
    w: (Cout, Cin, KD, KH, KW)  (PyTorch OIDHW)
    b: (Cout,)
    returns (B, Cout, Do, Ho, Wo)
    """
    B, Cin, D, H, W = x.shape
    Cout, Cin_w, KD, KH, KW = w.shape
    assert Cin == Cin_w
    sd, sh, sw = _triple(stride)
    pd, ph, pw = _triple(padding)
    Do = (D + 2 * pd - KD) // sd + 1
    Ho = (H + 2 * ph - KH) // sh + 1
    Wo = (W + 2 * pw - KW) // sw + 1

    K = KD * KH * KW * Cin          # im2col contraction dim
    M = B * Do * Ho * Wo            # total output rows
    TM = min(tile_m, _round_up(M, 8))
    Mp = _round_up(M, TM)
    Cout_p = _round_up(Cout, 128)   # lane-dense output

    # ---- wrapper-side layout plumbing (pure data movement, fused by XLA) ----
    xl = jnp.transpose(x, (0, 2, 3, 4, 1)).astype(compute_dtype)     # (B,D,H,W,Cin)
    xp = jnp.pad(xl, ((0, 0), (pd, pd), (ph, ph), (pw, pw), (0, 0)))
    cols = []
    for kd in range(KD):                      # K order: kd, kh, kw, cin (cin fastest)
        for kh in range(KH):
            for kw in range(KW):
                sl = jax.lax.slice(
                    xp,
                    (0, kd, kh, kw, 0),
                    (B, kd + (Do - 1) * sd + 1, kh + (Ho - 1) * sh + 1,
                     kw + (Wo - 1) * sw + 1, Cin),
                    (1, sd, sh, sw, 1))                              # (B,Do,Ho,Wo,Cin)
                cols.append(sl)
    patches = jnp.concatenate(cols, axis=-1).reshape(M, K)
    patches = jnp.pad(patches, ((0, Mp - M), (0, 0)))

    # flat, lane-dense weights (K, Cout_p) matching the patch K ordering; f32 bias
    w2 = jnp.transpose(w, (2, 3, 4, 1, 0)).reshape(K, Cout).astype(compute_dtype)
    w2 = jnp.pad(w2, ((0, 0), (0, Cout_p - Cout)))
    b2 = jnp.pad(b.astype(jnp.float32).reshape(1, Cout), ((0, 0), (0, Cout_p - Cout)))

    # ---- VMEM budget (double-buffered tiles + resident weights) + headroom ----
    itemsize = jnp.dtype(compute_dtype).itemsize
    Kp = _round_up(K, 128)
    vmem_bytes = (2 * TM * Kp * itemsize            # patch tile, double-buffered
                  + 2 * TM * Cout_p * 4             # f32 output tile, double-buffered
                  + _round_up(K, 8) * Cout_p * itemsize   # resident weights
                  + 8 * Cout_p * 4)                 # bias
    vmem_limit = int(min(64 << 20, max(16 << 20, 2 * vmem_bytes + (2 << 20))))

    cost = pl.CostEstimate(
        flops=2 * M * K * Cout,
        transcendentals=M * Cout,
        bytes_accessed=Mp * K * itemsize + K * Cout_p * itemsize + Mp * Cout_p * 4,
    )

    out = pl.pallas_call(
        _matmul_bias_elu_kernel,
        out_shape=jax.ShapeDtypeStruct((Mp, Cout_p), jnp.float32),
        grid=(Mp // TM,),
        in_specs=[
            pl.BlockSpec((TM, K), lambda i: (i, 0)),
            pl.BlockSpec((K, Cout_p), lambda i: (0, 0)),   # constant -> VMEM-resident
            pl.BlockSpec((1, Cout_p), lambda i: (0, 0)),
        ],
        out_specs=pl.BlockSpec((TM, Cout_p), lambda i: (i, 0)),
        compiler_params=pltpu.CompilerParams(
            dimension_semantics=("parallel",),
            vmem_limit_bytes=vmem_limit),
        cost_estimate=cost,
    )(patches, w2, b2)

    out = out[:M, :Cout].reshape(B, Do, Ho, Wo, Cout)
    return jnp.transpose(out, (0, 4, 1, 2, 3)).astype(x.dtype)   # back to NCDHW


def _reference(x, w, b, stride, padding, compute_dtype=jnp.bfloat16):
    # Reference uses the same bf16-quantized inputs so the comparison isolates
    # the kernel (bf16 x bf16 products are exact in f32; accumulation is f32).
    xq = x.astype(compute_dtype).astype(jnp.float32)
    wq = w.astype(compute_dtype).astype(jnp.float32)
    y = jax.lax.conv_general_dilated(
        xq, wq,
        window_strides=_triple(stride),
        padding=[(p, p) for p in _triple(padding)],
        dimension_numbers=("NCDHW", "OIDHW", "NCDHW"))
    y = y + b[None, :, None, None, None].astype(jnp.float32)
    return jnp.where(y > 0, y, jnp.exp(jnp.minimum(y, 0.0)) - 1.0)


if __name__ == "__main__":
    # Small shapes consistent with the module's forward (NCDHW input).
    B, Cin, Cout = 2, 4, 8
    D, H, W = 4, 8, 8
    KD = KH = KW = 3
    stride = (1, 1, 1)
    padding = (1, 1, 1)

    key = jax.random.PRNGKey(0)
    kx, kw_, kb_ = jax.random.split(key, 3)

    # Deterministic parameter init (Conv3d-style uniform bounds).
    fan_in = Cin * KD * KH * KW
    bound = 1.0 / math.sqrt(fan_in)
    w = jax.random.uniform(kw_, (Cout, Cin, KD, KH, KW), jnp.float32, -bound, bound)
    b = jax.random.uniform(kb_, (Cout,), jnp.float32, -bound, bound)
    x = jax.random.normal(kx, (B, Cin, D, H, W), jnp.float32)

    out = conv_block_3d(x, w, b, stride, padding)
    out = jax.block_until_ready(out)

    ref = jax.block_until_ready(_reference(x, w, b, stride, padding))
    assert out.shape == ref.shape, (out.shape, ref.shape)
    assert jnp.allclose(out, ref, atol=1e-3, rtol=1e-3), \
        float(jnp.max(jnp.abs(out - ref)))

    print("KERNEL_OK")
</pallas_src>

<mosaic_0001>
module attributes {stable_mosaic.version = 11 : i64} {
  func.func @_matmul_bias_elu_kernel(%arg0: i32, %arg1: memref<256x108xbf16, #tpu.memory_space<vmem>>, %arg2: memref<108x128xbf16, #tpu.memory_space<vmem>>, %arg3: memref<1x128xf32, #tpu.memory_space<vmem>>, %arg4: memref<256x128xf32, #tpu.memory_space<vmem>>) attributes {dimension_semantics = [#tpu.dimension_semantics<parallel>], iteration_bounds = array<i64: 2>, scalar_prefetch = 0 : i64, scratch_operands = 0 : i64, tpu.core_type = #tpu.core_type<tc>, window_params = [{transform_indices = @transform_0, window_bounds = array<i64: 256, 108>}, {pipeline_mode = #tpu.pipeline_mode<synchronous>, transform_indices = @transform_1, window_bounds = array<i64: 108, 128>}, {pipeline_mode = #tpu.pipeline_mode<synchronous>, transform_indices = @transform_2, window_bounds = array<i64: 1, 128>}, {transform_indices = @transform_3, window_bounds = array<i64: 256, 128>}]} {
    %c0 = arith.constant 0 : index
    %c0_0 = arith.constant 0 : index
    %0 = vector.load %arg1[%c0, %c0_0] : memref<256x108xbf16, #tpu.memory_space<vmem>>, vector<256x108xbf16>
    %c0_1 = arith.constant 0 : index
    %c0_2 = arith.constant 0 : index
    %1 = vector.load %arg2[%c0_1, %c0_2] : memref<108x128xbf16, #tpu.memory_space<vmem>>, vector<108x128xbf16>
    %cst = arith.constant dense<0.000000e+00> : vector<256x128xf32>
    %2 = tpu.matmul %0, %1, %cst {dimension_numbers = #tpu.dot_dimension_numbers<[1], [0], [0], [1], [0, 0, 1, 1], [], []>} : vector<256x108xbf16>, vector<108x128xbf16>, vector<256x128xf32> -> vector<256x128xf32>
    %c0_3 = arith.constant 0 : index
    %c0_4 = arith.constant 0 : index
    %3 = vector.load %arg3[%c0_3, %c0_4] : memref<1x128xf32, #tpu.memory_space<vmem>>, vector<1x128xf32>
    %4 = vector.broadcast %3 : vector<1x128xf32> to vector<256x128xf32>
    %5 = arith.addf %2, %4 : vector<256x128xf32>
    %cst_5 = arith.constant 0.000000e+00 : f32
    %6 = vector.broadcast %cst_5 : f32 to vector<256x128xf32>
    %7 = arith.minimumf %5, %6 : vector<256x128xf32>
    %8 = math.exp %7 : vector<256x128xf32>
    %cst_6 = arith.constant 1.000000e+00 : f32
    %9 = vector.broadcast %cst_6 : f32 to vector<256x128xf32>
    %10 = arith.subf %8, %9 : vector<256x128xf32>
    %cst_7 = arith.constant 0.000000e+00 : f32
    %11 = vector.broadcast %cst_7 : f32 to vector<256x128xf32>
    %12 = arith.cmpf ogt, %5, %11 : vector<256x128xf32>
    %13 = arith.select %12, %5, %10 : vector<256x128xi1>, vector<256x128xf32>
    %c0_8 = arith.constant 0 : index
    %c0_9 = arith.constant 0 : index
    %14 = vector.load %arg4[%c0_8, %c0_9] : memref<256x128xf32, #tpu.memory_space<vmem>>, vector<256x128xf32>
    tpu.vector_store %arg4[%c0_8, %c0_9], %13 {strides = array<i32>} : memref<256x128xf32, #tpu.memory_space<vmem>>, vector<256x128xf32>,
    return
  }
  func.func @transform_0(%arg0: i32) -> (i32, i32) {
    %c0_i32 = arith.constant 0 : i32
    %c0_i32_0 = arith.constant 0 : i32
    return %arg0, %c0_i32 : i32, i32
  }
  func.func @transform_1(%arg0: i32) -> (i32, i32) {
    %c0_i32 = arith.constant 0 : i32
    %c0_i32_0 = arith.constant 0 : i32
    %c0_i32_1 = arith.constant 0 : i32
    return %c0_i32, %c0_i32_0 : i32, i32
  }
  func.func @transform_2(%arg0: i32) -> (i32, i32) {
    %c0_i32 = arith.constant 0 : i32
    %c0_i32_0 = arith.constant 0 : i32
    %c0_i32_1 = arith.constant 0 : i32
    return %c0_i32, %c0_i32_0 : i32, i32
  }
  func.func @transform_3(%arg0: i32) -> (i32, i32) {
    %c0_i32 = arith.constant 0 : i32
    %c0_i32_0 = arith.constant 0 : i32
    return %arg0, %c0_i32 : i32, i32
  }
}

</mosaic_0001>

<llo_original>
// kernel: tpu_custom_call.1
$region0: #{tpu_custom_call.1}
  #allocation0 [shape = 'u32[]', space=smem, size = 0x4, offset = 0x4, fixed_abs, tag = 'smem constant byte address 0x4 - core index']
  #allocation1 [shape = 'u32[144,128]{1,0:T(1,128)}', space=vmem, size = 0x12000, scoped, tag = 'internal scratch']
  %s0 = inlined_call_operand.vmem [shape: bf16[512,108], index: 0, kind: input, shape index: {}]
  %s1 = inlined_call_operand.vmem [shape: bf16[108,128], index: 1, kind: input, shape index: {}]
  %s2 = inlined_call_operand.vmem [shape: f32[1,128], index: 2, kind: input, shape index: {}]
  %s3 = inlined_call_operand.hbm [shape: f32[512,128], index: 3, kind: output, shape index: {}]
  %s4 = sld [smem:[#allocation0]]
  $region45: #{tpu_custom_call.1} parent=0
    _
  %s6 = ssub.s32 1, %s4
  %s7 = scalar_select 0, %s6, %s4
  $region1: #{tpu_custom_call.1} parent=0
    #allocation2 [shape = 'u8[262144]{0}', space=vmem, size = 0x40000, scoped, tag = 'output window, operand 0']
    #allocation3 [shape = 's32[2]{0}', space=sflag, size = 0x8, scoped, tag = 'scoped memory for tpu_custom_call.1']
    %8 = vsyncpa [#allocation3], 0
    %s9 = scalar_lea.sflag [#allocation3], 1
    %10 = vsyncpa %s9, 0
    loop: start=0, step=1, limit=4
    $region2: #{tpu_custom_call.1} parent=1 // loop_pre_header
      _
    $region3: #{tpu_custom_call.1} parent=1 // loop_header
      %s12 = sphi 0, %s16
      %p13 = scmp.ge.s32.totalorder %s12, 4
      %s22 = sphi 0, %s24
      %s25 = sphi 0, %s22
      %s26 = sphi 0, %s25
      %s42 = sphi 0, %s26
      %s46 = sphi 0, %s46
      %s48 = sphi 0, %s46
      %s49 = sphi 0, %s48
      %s63 = sphi 0, %s49
      %s67 = sphi 0, %s67
      %s69 = sphi 0, %s67
      %s70 = sphi 0, %s69
      %s84 = sphi 0, %s70
      %s90 = sphi 0, %s92
      %s93 = sphi 0, %s90
      %s94 = sphi 0, %s93
      %s110 = sphi 0, %s94
    $region4: #{tpu_custom_call.1} parent=1 // loop_header_branch
      %15 = sbr.rel (%p13) target = $region8
    $region5: #{tpu_custom_call.1} parent=1 // loop_body
      %s17 = ssub.s32 %s12, 1
      %s18 = ssub.s32 %s12, 2
      %s19 = sadd.s32 %s12, 1
      %s20 = ssub.s32 %s12, %s19
      %p21 = scmp.eq.s32.totalorder %s20, 0
      %s23 = sadd.s32 %s22, 1
      %s24 = scalar_select %p21, %s22, %s23
      %p27 = pneg %p21
      %p28 = scmp.eq.s32.totalorder %s12, 1
      %p29 = por %p27, %p28
      %p30 = scmp.ne.s32.totalorder %s22, %s25
      %p31 = scmp.eq.s32.totalorder %s12, 0
      %p32 = por %p30, %p31
      %p33 = scmp.ne.s32.totalorder %s22, %s25
      %p34 = scmp.eq.s32.totalorder %s17, 1
      %p35 = por %p33, %p34
      %p36 = scmp.ne.s32.totalorder %s25, %s26
      %p37 = scmp.eq.s32.totalorder %s17, 0
      %p38 = por %p36, %p37
      %p39 = scmp.ne.s32.totalorder %s25, %s26
      %p40 = scmp.eq.s32.totalorder %s18, 1
      %p41 = por %p39, %p40
      %p43 = scmp.ne.s32.totalorder %s26, %s42
      %p44 = scmp.eq.s32.totalorder %s18, 0
      %p45 = por %p43, %p44
      %s47 = sadd.s32 %s46, 1
      %p50 = scmp.eq.s32.totalorder %s12, 1
      %p51 = scmp.ne.s32.totalorder %s46, %s48
      %p52 = scmp.eq.s32.totalorder %s12, 0
      %p53 = por %p51, %p52
      %p54 = scmp.ne.s32.totalorder %s46, %s48
      %p55 = scmp.eq.s32.totalorder %s17, 1
      %p56 = por %p54, %p55
      %p57 = scmp.ne.s32.totalorder %s48, %s49
      %p58 = scmp.eq.s32.totalorder %s17, 0
      %p59 = por %p57, %p58
      %p60 = scmp.ne.s32.totalorder %s48, %s49
      %p61 = scmp.eq.s32.totalorder %s18, 1
      %p62 = por %p60, %p61
      %p64 = scmp.ne.s32.totalorder %s49, %s63
      %p65 = scmp.eq.s32.totalorder %s18, 0
      %p66 = por %p64, %p65
      %s68 = sadd.s32 %s67, 1
      %p71 = scmp.eq.s32.totalorder %s12, 1
      %p72 = scmp.ne.s32.totalorder %s67, %s69
      %p73 = scmp.eq.s32.totalorder %s12, 0
      %p74 = por %p72, %p73
      %p75 = scmp.ne.s32.totalorder %s67, %s69
      %p76 = scmp.eq.s32.totalorder %s17, 1
      %p77 = por %p75, %p76
      %p78 = scmp.ne.s32.totalorder %s69, %s70
      %p79 = scmp.eq.s32.totalorder %s17, 0
      %p80 = por %p78, %p79
      %p81 = scmp.ne.s32.totalorder %s69, %s70
      %p82 = scmp.eq.s32.totalorder %s18, 1
      %p83 = por %p81, %p82
      %p85 = scmp.ne.s32.totalorder %s70, %s84
      %p86 = scmp.eq.s32.totalorder %s18, 0
      %p87 = por %p85, %p86
      %s88 = ssub.s32 %s12, %s19
      %p89 = scmp.eq.s32.totalorder %s88, 0
      %s91 = sadd.s32 %s90, 1
      %s92 = scalar_select %p89, %s90, %s91
      %p95 = pneg %p89
      %p96 = scmp.eq.s32.totalorder %s12, 1
      %p97 = por %p95, %p96
      %p98 = scmp.ne.s32.totalorder %s90, %s93
      %p99 = scmp.eq.s32.totalorder %s12, 0
      %p100 = por %p98, %p99
      %p101 = scmp.ne.s32.totalorder %s90, %s93
      %p102 = scmp.eq.s32.totalorder %s17, 1
      %p103 = por %p101, %p102
      %p104 = scmp.ne.s32.totalorder %s93, %s94
      %p105 = scmp.eq.s32.totalorder %s17, 0
      %p106 = por %p104, %p105
      %p107 = scmp.ne.s32.totalorder %s93, %s94
      %p108 = scmp.eq.s32.totalorder %s18, 1
      %p109 = por %p107, %p108
      %p111 = scmp.ne.s32.totalorder %s94, %s110
      %p112 = scmp.eq.s32.totalorder %s18, 0
      %p113 = por %p111, %p112
      %p114 = scmp.le.s32.totalorder 1, %s12
      %p115 = scmp.lt.s32.totalorder %s12, 3
      %p116 = pnand %p114, %p115
      %p117 = pneg %p116
      // Predicated region
      $region9: #{tpu_custom_call.1} parent=5 // pred_check
        _
      $region10: #{tpu_custom_call.1} parent=5 // pred_check_branch
        %119 = sbr.rel (%p116) target = $region12
      $region11: #{tpu_custom_call.1} parent=5 // pred_region
        %s120 = ssub.s32 %s12, 1
        // Predicated region
        $region13: #{tpu_custom_call.1} parent=11 // pred_check
          %p121 = pneg %p59
        $region14: #{tpu_custom_call.1} parent=11 // pred_check_branch
          %123 = sbr.rel (%p121) target = $region16
        $region15: #{tpu_custom_call.1} parent=11 // pred_region
          _
        $region16: #{tpu_custom_call.1} parent=11 // pred_fallthru
          _
        // Predicated region
        $region17: #{tpu_custom_call.1} parent=11 // pred_check
          %p124 = pneg %p80
        $region18: #{tpu_custom_call.1} parent=11 // pred_check_branch
          %126 = sbr.rel (%p124) target = $region20
        $region19: #{tpu_custom_call.1} parent=11 // pred_region
          _
        $region20: #{tpu_custom_call.1} parent=11 // pred_fallthru
          _
      $region12: #{tpu_custom_call.1} parent=5 // pred_fallthru
        _
      %p127 = scmp.lt.s32.totalorder %s12, 2
      // Predicated region
      $region21: #{tpu_custom_call.1} parent=5 // pred_check
        %p128 = pneg %p127
      $region22: #{tpu_custom_call.1} parent=5 // pred_check_branch
        %130 = sbr.rel (%p128) target = $region24
      $region23: #{tpu_custom_call.1} parent=5 // pred_region
        // Predicated region
        $region25: #{tpu_custom_call.1} parent=23 // pred_check
          %p131 = pneg %p32
        $region26: #{tpu_custom_call.1} parent=23 // pred_check_branch
          %133 = sbr.rel (%p131) target = $region28
        $region27: #{tpu_custom_call.1} parent=23 // pred_region
          %s134 = smul.u32 32, %s12
          %p135 = scmp.lt.s32.totalorder %s134, 63
          %s136 = scalar_select %p135, %s134, 63
          %s137 = smul.addr %s136, 4
          %s138 = scalar_lea.vmem %s0, %s137
          %s139 = smul.u32 32, %s12
        $region28: #{tpu_custom_call.1} parent=23 // pred_fallthru
          _
      $region24: #{tpu_custom_call.1} parent=5 // pred_fallthru
        _
      %p140 = scmp.le.s32.totalorder 1, %s12
      %p141 = scmp.lt.s32.totalorder %s12, 3
      %p142 = pnand %p140, %p141
      %p143 = pneg %p142
      // Predicated region
      $region29: #{tpu_custom_call.1} parent=5 // pred_check
        _
      $region30: #{tpu_custom_call.1} parent=5 // pred_check_branch
        %145 = sbr.rel (%p142) target = $region32
      $region31: #{tpu_custom_call.1} parent=5 // pred_region
        %s146 = ssub.s32 %s12, 1
        %s147 = smul.u32 32, %s17
        %p148 = scmp.lt.s32.totalorder %s147, 63
        %s149 = scalar_select %p148, %s147, 63
        %s150 = smul.addr %s149, 4
        %s151 = scalar_lea.vmem %s0, %s150
        %p152 = pneg %p38
        %p153 = pneg %p35
        %p154 = pneg %p59
        %p155 = pneg %p56
        %p156 = pneg %p80
        %p157 = pneg %p77
        %p158 = pneg %p106
        %p159 = pneg %p103
        %s160 = sand.u32 %s93, 1
        %s161 = scalar_lea.sflag [#allocation3], %s160
        %s162 = sand.u32 %s93, 1
        %s163 = smul.addr %s162, 256
        %s164 = scalar_lea.vmem [#allocation2], %s163
        %s165 = smul.u32 32, %s17
        %p166 = scmp.lt.s32.totalorder %s165, 63
        %s167 = scalar_select %p166, %s165, 63
        %s168 = smul.addr %s167, 4
        %s169 = scalar_lea.vmem %s0, %s168
        %s170 = smul.u32 32, %s17
        %s171 = smul.u32 32, %s17
        %v173 = vld [vmem:[%s169] sm:$0xf]
        %v174 = vld [vmem:[%s169 + $0x4] sm:$0xf]
        %v175 = vld [vmem:[%s169 + $0x8] sm:$0xf]
        %v176 = vld [vmem:[%s169 + $0xc] sm:$0xf]
        %v177 = vld [vmem:[%s169 + $0x10] sm:$0xf]
        %v178 = vld [vmem:[%s169 + $0x14] sm:$0xf]
        %v179 = vld [vmem:[%s169 + $0x18] sm:$0xf]
        %v180 = vld [vmem:[%s169 + $0x1c] sm:$0xf]
        %v181 = vld [vmem:[%s169 + $0x20] sm:$0xf]
        %v182 = vld [vmem:[%s169 + $0x24] sm:$0xf]
        %v183 = vld [vmem:[%s169 + $0x28] sm:$0xf]
        %v184 = vld [vmem:[%s169 + $0x2c] sm:$0xf]
        %v185 = vld [vmem:[%s169 + $0x30] sm:$0xf]
        %v186 = vld [vmem:[%s169 + $0x34] sm:$0xf]
        %v187 = vld [vmem:[%s169 + $0x38] sm:$0xf]
        %v188 = vld [vmem:[%s169 + $0x3c] sm:$0xf]
        %v189 = vld [vmem:[%s169 + $0x40] sm:$0xf]
        %v190 = vld [vmem:[%s169 + $0x44] sm:$0xf]
        %v191 = vld [vmem:[%s169 + $0x48] sm:$0xf]
        %v192 = vld [vmem:[%s169 + $0x4c] sm:$0xf]
        %v193 = vld [vmem:[%s169 + $0x50] sm:$0xf]
        %v194 = vld [vmem:[%s169 + $0x54] sm:$0xf]
        %v195 = vld [vmem:[%s169 + $0x58] sm:$0xf]
        %v196 = vld [vmem:[%s169 + $0x5c] sm:$0xf]
        %v197 = vld [vmem:[%s169 + $0x60] sm:$0xf]
        %v198 = vld [vmem:[%s169 + $0x64] sm:$0xf]
        %v199 = vld [vmem:[%s169 + $0x68] sm:$0xf]
        %v200 = vld [vmem:[%s169 + $0x6c] sm:$0xf]
        %v201 = vld [vmem:[%s169 + $0x70] sm:$0xf]
        %v202 = vld [vmem:[%s169 + $0x74] sm:$0xf]
        %v203 = vld [vmem:[%s169 + $0x78] sm:$0xf]
        %v204 = vld [vmem:[%s169 + $0x7c] sm:$0xf]
        %v205 = vld [vmem:[%s1] sm:$0xf]
        %v206 = vld [vmem:[%s1 + $0x4] sm:$0xf]
        %v207 = vld [vmem:[%s1 + $0x8] sm:$0xf]
        %v208 = vld [vmem:[%s1 + $0xc] sm:$0xf]
        %v209 = vld [vmem:[%s1 + $0x10] sm:$0xf]
        %v210 = vld [vmem:[%s1 + $0x14] sm:$0xf]
        %v211 = vld [vmem:[%s1 + $0x18] sm:$0xf]
        %v212 = vld [vmem:[%s1 + $0x1c] sm:$0xf]
        %v213 = vld [vmem:[%s1 + $0x20] sm:$0xf]
        %v214 = vld [vmem:[%s1 + $0x24] sm:$0xf]
        %v215 = vld [vmem:[%s1 + $0x28] sm:$0xf]
        %v216 = vld [vmem:[%s1 + $0x2c] sm:$0xf]
        %v217 = vld [vmem:[%s1 + $0x30] sm:$0xf]
        %v218 = vld [vmem:[%s1 + $0x34] sm:$0x3]
        %v219 = vld [vmem:[%s2] sm:$0x1]
        %v221 = vlaneseq
        %v222 = vshrl.u32 %v221, 7
        %v223 = vsub.s32 0, %v222
        %v224 = vrot.slane %v219, %v223
        %v258 = vunpack.c.l.b16 %v173
        %v259 = vunpack.c.l.b16 %v174
        %v260 = vunpack.c.l.b16 %v175
        %v261 = vunpack.c.l.b16 %v176
        %v262 = vunpack.c.l.b16 %v177
        %v263 = vunpack.c.l.b16 %v178
        %v264 = vunpack.c.l.b16 %v179
        %v265 = vunpack.c.l.b16 %v180
        %v266 = vunpack.c.l.b16 %v181
        %v267 = vunpack.c.l.b16 %v182
        %v268 = vunpack.c.l.b16 %v183
        %v269 = vunpack.c.l.b16 %v184
        %v270 = vunpack.c.l.b16 %v185
        %v271 = vunpack.c.l.b16 %v186
        %v272 = vunpack.c.l.b16 %v187
        %v273 = vunpack.c.l.b16 %v188
        %v274 = vunpack.c.l.b16 %v189
        %v275 = vunpack.c.l.b16 %v190
        %v276 = vunpack.c.l.b16 %v191
        %v277 = vunpack.c.l.b16 %v192
        %v278 = vunpack.c.l.b16 %v193
        %v279 = vunpack.c.l.b16 %v194
        %v280 = vunpack.c.l.b16 %v195
        %v281 = vunpack.c.l.b16 %v196
        %v282 = vunpack.c.l.b16 %v197
        %v283 = vunpack.c.l.b16 %v198
        %v284 = vunpack.c.l.b16 %v199
        %v285 = vunpack.c.l.b16 %v200
        %v286 = vunpack.c.l.b16 %v201
        %v287 = vunpack.c.l.b16 %v202
        %v288 = vunpack.c.l.b16 %v203
        %v289 = vunpack.c.l.b16 %v204
        %v290 = vpack.c.b16 %v259, %v258
        %v291 = vpack.c.b16 %v261, %v260
        %v292 = vpack.c.b16 %v263, %v262
        %v293 = vpack.c.b16 %v265, %v264
        %v294 = vpack.c.b16 %v267, %v266
        %v295 = vpack.c.b16 %v269, %v268
        %v296 = vpack.c.b16 %v271, %v270
        %v297 = vpack.c.b16 %v273, %v272
        %v298 = vpack.c.b16 %v275, %v274
        %v299 = vpack.c.b16 %v277, %v276
        %v300 = vpack.c.b16 %v279, %v278
        %v301 = vpack.c.b16 %v281, %v280
        %v302 = vpack.c.b16 %v283, %v282
        %v303 = vpack.c.b16 %v285, %v284
        %v304 = vpack.c.b16 %v287, %v286
        %v305 = vpack.c.b16 %v289, %v288
        %v320 = vunpack.c.l.b16 %v205
        %v321 = vunpack.c.l.b16 %v206
        %v322 = vunpack.c.l.b16 %v207
        %v323 = vunpack.c.l.b16 %v208
        %v324 = vunpack.c.l.b16 %v209
        %v325 = vunpack.c.l.b16 %v210
        %v326 = vunpack.c.l.b16 %v211
        %v327 = vunpack.c.l.b16 %v212
        %v328 = vunpack.c.l.b16 %v213
        %v329 = vunpack.c.l.b16 %v214
        %v330 = vunpack.c.l.b16 %v215
        %v331 = vunpack.c.l.b16 %v216
        %v332 = vunpack.c.l.b16 %v217
        %v333 = vunpack.c.l.b16 %v218
        %v334 = vpack.c.b16 %v321, %v320
        %v335 = vpack.c.b16 %v323, %v322
        %v336 = vpack.c.b16 %v325, %v324
        %v337 = vpack.c.b16 %v327, %v326
        %v338 = vpack.c.b16 %v329, %v328
        %v339 = vpack.c.b16 %v331, %v330
        %v340 = vpack.c.b16 %v333, %v332
        %vm347 = vcmask 883712
        %v349 = vsel %vm347, %v290, 0
        %v352 = vsel %vm347, %v291, 0
        %v355 = vsel %vm347, %v292, 0
        %v358 = vsel %vm347, %v293, 0
        %v361 = vsel %vm347, %v294, 0
        %v364 = vsel %vm347, %v295, 0
        %v367 = vsel %vm347, %v296, 0
        %v370 = vsel %vm347, %v297, 0
        %v373 = vsel %vm347, %v298, 0
        %v376 = vsel %vm347, %v299, 0
        %v379 = vsel %vm347, %v300, 0
        %v382 = vsel %vm347, %v301, 0
        %v385 = vsel %vm347, %v302, 0
        %v388 = vsel %vm347, %v303, 0
        %v391 = vsel %vm347, %v304, 0
        %v394 = vsel %vm347, %v305, 0
        %vm396 = vcmask 1045504
        %v398 = vsel %vm396, %v340, 0
        %400 = vmatprep.subr.bf16.mxu0 0
        %401 = vmatpush1.bf16.msra.mxu0 %v334
        %402 = vmatprep.subr.bf16.mxu0 0
        %403 = vmatpush1.bf16.msra.mxu0 %v335
        %404 = vmatprep.subr.bf16.mxu0 0
        %405 = vmatpush1.bf16.msra.mxu0 %v336
        %406 = vmatprep.subr.bf16.mxu0 0
        %407 = vmatpush1.bf16.msra.mxu0 %v337
        %408 = vmatprep.subr.bf16.mxu0 0
        %409 = vmatpush1.bf16.msra.mxu0 %v338
        %410 = vmatprep.subr.bf16.mxu0 0
        %411 = vmatpush1.bf16.msra.mxu0 %v339
        %412 = vmatprep.subr.bf16.mxu0 0
        %413 = vmatpush1.bf16.msra.mxu0 %v398
        %414 = vmatprep.subr.bf16.mxu0 0
        %415 = vmatpush1.bf16.msra.mxu0 0
        %416 = vmatprep.subr.bf16.mxu0 0
        %417 = vmatpush1.bf16.msra.mxu0 0
        %418 = vmatprep.subr.bf16.mxu0 0
        %419 = vmatpush1.bf16.msra.mxu0 0
        %420 = vmatprep.subr.bf16.mxu0 0
        %421 = vmatpush1.bf16.msra.mxu0 0
        %422 = vmatprep.subr.bf16.mxu0 0
        %423 = vmatpush1.bf16.msra.mxu0 0
        %424 = vmatprep.subr.bf16.mxu0 0
        %425 = vmatpush1.bf16.msra.mxu0 0
        %426 = vmatprep.subr.bf16.mxu0 0
        %427 = vmatpush1.bf16.msra.mxu0 0
        %428 = vmatprep.subr.bf16.mxu0 0
        %429 = vmatpush1.bf16.msra.mxu0 0
        %430 = vmatprep.subr.bf16.mxu0 0
        %431 = vmatpush1.bf16.msra.mxu0 0
        %432 = vmatprep.mubr.bf16.mxu0 0
        %433 = vmatmul.mubr.bf16.gmra.mrb[0].mxu0 %v349
        %v434 = vpop.f32.mrb[0].mxu0
        %v435 = vadd.f32 %v224, %v434
        %v436 = vpop.f32.mrb[0].mxu0
        %v437 = vpop.f32.mrb[0].mxu0
        %v438 = vadd.f32 %v224, %v437
        %v439 = vpop.f32.mrb[0].mxu0
        %440 = vmatprep.mubr.bf16.mxu0 0
        %441 = vmatmul.mubr.bf16.gmra.mrb[0].mxu0 %v352
        %v442 = vpop.f32.mrb[0].mxu0
        %v443 = vadd.f32 %v224, %v442
        %v444 = vpop.f32.mrb[0].mxu0
        %v445 = vpop.f32.mrb[0].mxu0
        %v446 = vadd.f32 %v224, %v445
        %v447 = vpop.f32.mrb[0].mxu0
        %448 = vmatprep.mubr.bf16.mxu0 0
        %449 = vmatmul.mubr.bf16.gmra.mrb[0].mxu0 %v355
        %v450 = vpop.f32.mrb[0].mxu0
        %v451 = vadd.f32 %v224, %v450
        %v452 = vpop.f32.mrb[0].mxu0
        %v453 = vpop.f32.mrb[0].mxu0
        %v454 = vadd.f32 %v224, %v453
        %v455 = vpop.f32.mrb[0].mxu0
        %456 = vmatprep.mubr.bf16.mxu0 0
        %457 = vmatmul.mubr.bf16.gmra.mrb[0].mxu0 %v358
        %v458 = vpop.f32.mrb[0].mxu0
        %v459 = vadd.f32 %v224, %v458
        %v460 = vpop.f32.mrb[0].mxu0
        %v461 = vpop.f32.mrb[0].mxu0
        %v462 = vadd.f32 %v224, %v461
        %v463 = vpop.f32.mrb[0].mxu0
        %464 = vmatprep.mubr.bf16.mxu0 0
        %465 = vmatmul.mubr.bf16.gmra.mrb[0].mxu0 %v361
        %v466 = vpop.f32.mrb[0].mxu0
        %v467 = vadd.f32 %v224, %v466
        %v468 = vpop.f32.mrb[0].mxu0
        %v469 = vpop.f32.mrb[0].mxu0
        %v470 = vadd.f32 %v224, %v469
        %v471 = vpop.f32.mrb[0].mxu0
        %472 = vmatprep.mubr.bf16.mxu0 0
        %473 = vmatmul.mubr.bf16.gmra.mrb[0].mxu0 %v364
        %v474 = vpop.f32.mrb[0].mxu0
        %v475 = vadd.f32 %v224, %v474
        %v476 = vpop.f32.mrb[0].mxu0
        %v477 = vpop.f32.mrb[0].mxu0
        %v478 = vadd.f32 %v224, %v477
        %v479 = vpop.f32.mrb[0].mxu0
        %480 = vmatprep.mubr.bf16.mxu0 0
        %481 = vmatmul.mubr.bf16.gmra.mrb[0].mxu0 %v367
        %v482 = vpop.f32.mrb[0].mxu0
        %v483 = vadd.f32 %v224, %v482
        %v484 = vpop.f32.mrb[0].mxu0
        %v485 = vpop.f32.mrb[0].mxu0
        %v486 = vadd.f32 %v224, %v485
        %v487 = vpop.f32.mrb[0].mxu0
        %488 = vmatprep.mubr.bf16.mxu0 0
        %489 = vmatmul.mubr.bf16.gmra.mrb[0].mxu0 %v370
        %v490 = vpop.f32.mrb[0].mxu0
        %v491 = vadd.f32 %v224, %v490
        %v492 = vpop.f32.mrb[0].mxu0
        %v493 = vpop.f32.mrb[0].mxu0
        %v494 = vadd.f32 %v224, %v493
        %v495 = vpop.f32.mrb[0].mxu0
        %496 = vmatprep.mubr.bf16.mxu0 0
        %497 = vmatmul.mubr.bf16.gmra.mrb[0].mxu0 %v373
        %v498 = vpop.f32.mrb[0].mxu0
        %v499 = vadd.f32 %v224, %v498
        %v500 = vpop.f32.mrb[0].mxu0
        %v501 = vpop.f32.mrb[0].mxu0
        %v502 = vadd.f32 %v224, %v501
        %v503 = vpop.f32.mrb[0].mxu0
        %504 = vmatprep.mubr.bf16.mxu0 0
        %505 = vmatmul.mubr.bf16.gmra.mrb[0].mxu0 %v376
        %v506 = vpop.f32.mrb[0].mxu0
        %v507 = vadd.f32 %v224, %v506
        %v508 = vpop.f32.mrb[0].mxu0
        %v509 = vpop.f32.mrb[0].mxu0
        %v510 = vadd.f32 %v224, %v509
        %v511 = vpop.f32.mrb[0].mxu0
        %512 = vmatprep.mubr.bf16.mxu0 0
        %513 = vmatmul.mubr.bf16.gmra.mrb[0].mxu0 %v379
        %v514 = vpop.f32.mrb[0].mxu0
        %v515 = vadd.f32 %v224, %v514
        %v516 = vpop.f32.mrb[0].mxu0
        %v517 = vpop.f32.mrb[0].mxu0
        %v518 = vadd.f32 %v224, %v517
        %v519 = vpop.f32.mrb[0].mxu0
        %520 = vmatprep.mubr.bf16.mxu0 0
        %521 = vmatmul.mubr.bf16.gmra.mrb[0].mxu0 %v382
        %v522 = vpop.f32.mrb[0].mxu0
        %v523 = vadd.f32 %v224, %v522
        %v524 = vpop.f32.mrb[0].mxu0
        %v525 = vpop.f32.mrb[0].mxu0
        %v526 = vadd.f32 %v224, %v525
        %v527 = vpop.f32.mrb[0].mxu0
        %528 = vmatprep.mubr.bf16.mxu0 0
        %529 = vmatmul.mubr.bf16.gmra.mrb[0].mxu0 %v385
        %v530 = vpop.f32.mrb[0].mxu0
        %v531 = vadd.f32 %v224, %v530
        %v532 = vpop.f32.mrb[0].mxu0
        %v533 = vpop.f32.mrb[0].mxu0
        %v534 = vadd.f32 %v224, %v533
        %v535 = vpop.f32.mrb[0].mxu0
        %536 = vmatprep.mubr.bf16.mxu0 0
        %537 = vmatmul.mubr.bf16.gmra.mrb[0].mxu0 %v388
        %v538 = vpop.f32.mrb[0].mxu0
        %v539 = vadd.f32 %v224, %v538
        %v540 = vpop.f32.mrb[0].mxu0
        %v541 = vpop.f32.mrb[0].mxu0
        %v542 = vadd.f32 %v224, %v541
        %v543 = vpop.f32.mrb[0].mxu0
        %544 = vmatprep.mubr.bf16.mxu0 0
        %545 = vmatmul.mubr.bf16.gmra.mrb[0].mxu0 %v391
        %v546 = vpop.f32.mrb[0].mxu0
        %v547 = vadd.f32 %v224, %v546
        %v548 = vpop.f32.mrb[0].mxu0
        %v549 = vpop.f32.mrb[0].mxu0
        %v550 = vadd.f32 %v224, %v549
        %v551 = vpop.f32.mrb[0].mxu0
        %552 = vmatprep.mubr.bf16.mxu0 0
        %553 = vmatmul.mubr.bf16.gmra.mrb[0].mxu0 %v394
        %v554 = vpop.f32.mrb[0].mxu0
        %v555 = vadd.f32 %v224, %v554
        %v556 = vpop.f32.mrb[0].mxu0
        %v557 = vpop.f32.mrb[0].mxu0
        %v558 = vadd.f32 %v224, %v557
        %v559 = vpop.f32.mrb[0].mxu0
        %560 = vdwg.mxu0
        %v561 = vmin.f32 %v435, 0.0
        %v562 = vmin.f32 %v438, 0.0
        %v563 = vmin.f32 %v443, 0.0
        %v564 = vmin.f32 %v446, 0.0
        %v565 = vmin.f32 %v451, 0.0
        %v566 = vmin.f32 %v454, 0.0
        %v567 = vmin.f32 %v459, 0.0
        %v568 = vmin.f32 %v462, 0.0
        %v569 = vmin.f32 %v467, 0.0
        %v570 = vmin.f32 %v470, 0.0
        %v571 = vmin.f32 %v475, 0.0
        %v572 = vmin.f32 %v478, 0.0
        %v573 = vmin.f32 %v483, 0.0
        %v574 = vmin.f32 %v486, 0.0
        %v575 = vmin.f32 %v491, 0.0
        %v576 = vmin.f32 %v494, 0.0
        %v577 = vmin.f32 %v499, 0.0
        %v578 = vmin.f32 %v502, 0.0
        %v579 = vmin.f32 %v507, 0.0
        %v580 = vmin.f32 %v510, 0.0
        %v581 = vmin.f32 %v515, 0.0
        %v582 = vmin.f32 %v518, 0.0
        %v583 = vmin.f32 %v523, 0.0
        %v584 = vmin.f32 %v526, 0.0
        %v585 = vmin.f32 %v531, 0.0
        %v586 = vmin.f32 %v534, 0.0
        %v587 = vmin.f32 %v539, 0.0
        %v588 = vmin.f32 %v542, 0.0
        %v589 = vmin.f32 %v547, 0.0
        %v590 = vmin.f32 %v550, 0.0
        %v591 = vmin.f32 %v555, 0.0
        %v592 = vmin.f32 %v558, 0.0
        %v593 = vmul.f32 %v561, 1.442695
        %v594 = vpow.pop %v593
        %v595 = vmul.f32 %v562, 1.442695
        %v596 = vpow.pop %v595
        %v597 = vmul.f32 %v563, 1.442695
        %v598 = vpow.pop %v597
        %v599 = vmul.f32 %v564, 1.442695
        %v600 = vpow.pop %v599
        %v601 = vmul.f32 %v565, 1.442695
        %v602 = vpow.pop %v601
        %v603 = vmul.f32 %v566, 1.442695
        %v604 = vpow.pop %v603
        %v605 = vmul.f32 %v567, 1.442695
        %v606 = vpow.pop %v605
        %v607 = vmul.f32 %v568, 1.442695
        %v608 = vpow.pop %v607
        %v609 = vmul.f32 %v569, 1.442695
        %v610 = vpow.pop %v609
        %v611 = vmul.f32 %v570, 1.442695
        %v612 = vpow.pop %v611
        %v613 = vmul.f32 %v571, 1.442695
        %v614 = vpow.pop %v613
        %v615 = vmul.f32 %v572, 1.442695
        %v616 = vpow.pop %v615
        %v617 = vmul.f32 %v573, 1.442695
        %v618 = vpow.pop %v617
        %v619 = vmul.f32 %v574, 1.442695
        %v620 = vpow.pop %v619
        %v621 = vmul.f32 %v575, 1.442695
        %v622 = vpow.pop %v621
        %v623 = vmul.f32 %v576, 1.442695
        %v624 = vpow.pop %v623
        %v625 = vmul.f32 %v577, 1.442695
        %v626 = vpow.pop %v625
        %v627 = vmul.f32 %v578, 1.442695
        %v628 = vpow.pop %v627
        %v629 = vmul.f32 %v579, 1.442695
        %v630 = vpow.pop %v629
        %v631 = vmul.f32 %v580, 1.442695
        %v632 = vpow.pop %v631
        %v633 = vmul.f32 %v581, 1.442695
        %v634 = vpow.pop %v633
        %v635 = vmul.f32 %v582, 1.442695
        %v636 = vpow.pop %v635
        %v637 = vmul.f32 %v583, 1.442695
        %v638 = vpow.pop %v637
        %v639 = vmul.f32 %v584, 1.442695
        %v640 = vpow.pop %v639
        %v641 = vmul.f32 %v585, 1.442695
        %v642 = vpow.pop %v641
        %v643 = vmul.f32 %v586, 1.442695
        %v644 = vpow.pop %v643
        %v645 = vmul.f32 %v587, 1.442695
        %v646 = vpow.pop %v645
        %v647 = vmul.f32 %v588, 1.442695
        %v648 = vpow.pop %v647
        %v649 = vmul.f32 %v589, 1.442695
        %v650 = vpow.pop %v649
        %v651 = vmul.f32 %v590, 1.442695
        %v652 = vpow.pop %v651
        %v653 = vmul.f32 %v591, 1.442695
        %v654 = vpow.pop %v653
        %v655 = vmul.f32 %v592, 1.442695
        %v656 = vpow.pop %v655
        %v657 = vsub.f32 %v594, 1.0
        %v658 = vsub.f32 %v596, 1.0
        %v659 = vsub.f32 %v598, 1.0
        %v660 = vsub.f32 %v600, 1.0
        %v661 = vsub.f32 %v602, 1.0
        %v662 = vsub.f32 %v604, 1.0
        %v663 = vsub.f32 %v606, 1.0
        %v664 = vsub.f32 %v608, 1.0
        %v665 = vsub.f32 %v610, 1.0
        %v666 = vsub.f32 %v612, 1.0
        %v667 = vsub.f32 %v614, 1.0
        %v668 = vsub.f32 %v616, 1.0
        %v669 = vsub.f32 %v618, 1.0
        %v670 = vsub.f32 %v620, 1.0
        %v671 = vsub.f32 %v622, 1.0
        %v672 = vsub.f32 %v624, 1.0
        %v673 = vsub.f32 %v626, 1.0
        %v674 = vsub.f32 %v628, 1.0
        %v675 = vsub.f32 %v630, 1.0
        %v676 = vsub.f32 %v632, 1.0
        %v677 = vsub.f32 %v634, 1.0
        %v678 = vsub.f32 %v636, 1.0
        %v679 = vsub.f32 %v638, 1.0
        %v680 = vsub.f32 %v640, 1.0
        %v681 = vsub.f32 %v642, 1.0
        %v682 = vsub.f32 %v644, 1.0
        %v683 = vsub.f32 %v646, 1.0
        %v684 = vsub.f32 %v648, 1.0
        %v685 = vsub.f32 %v650, 1.0
        %v686 = vsub.f32 %v652, 1.0
        %v687 = vsub.f32 %v654, 1.0
        %v688 = vsub.f32 %v656, 1.0
        %vm689 = vcmp.gt.f32.partialorder %v435, 0.0
        %vm690 = vcmp.gt.f32.partialorder %v438, 0.0
        %vm691 = vcmp.gt.f32.partialorder %v443, 0.0
        %vm692 = vcmp.gt.f32.partialorder %v446, 0.0
        %vm693 = vcmp.gt.f32.partialorder %v451, 0.0
        %vm694 = vcmp.gt.f32.partialorder %v454, 0.0
        %vm695 = vcmp.gt.f32.partialorder %v459, 0.0
        %vm696 = vcmp.gt.f32.partialorder %v462, 0.0
        %vm697 = vcmp.gt.f32.partialorder %v467, 0.0
        %vm698 = vcmp.gt.f32.partialorder %v470, 0.0
        %vm699 = vcmp.gt.f32.partialorder %v475, 0.0
        %vm700 = vcmp.gt.f32.partialorder %v478, 0.0
        %vm701 = vcmp.gt.f32.partialorder %v483, 0.0
        %vm702 = vcmp.gt.f32.partialorder %v486, 0.0
        %vm703 = vcmp.gt.f32.partialorder %v491, 0.0
        %vm704 = vcmp.gt.f32.partialorder %v494, 0.0
        %vm705 = vcmp.gt.f32.partialorder %v499, 0.0
        %vm706 = vcmp.gt.f32.partialorder %v502, 0.0
        %vm707 = vcmp.gt.f32.partialorder %v507, 0.0
        %vm708 = vcmp.gt.f32.partialorder %v510, 0.0
        %vm709 = vcmp.gt.f32.partialorder %v515, 0.0
        %vm710 = vcmp.gt.f32.partialorder %v518, 0.0
        %vm711 = vcmp.gt.f32.partialorder %v523, 0.0
        %vm712 = vcmp.gt.f32.partialorder %v526, 0.0
        %vm713 = vcmp.gt.f32.partialorder %v531, 0.0
        %vm714 = vcmp.gt.f32.partialorder %v534, 0.0
        %vm715 = vcmp.gt.f32.partialorder %v539, 0.0
        %vm716 = vcmp.gt.f32.partialorder %v542, 0.0
        %vm717 = vcmp.gt.f32.partialorder %v547, 0.0
        %vm718 = vcmp.gt.f32.partialorder %v550, 0.0
        %vm719 = vcmp.gt.f32.partialorder %v555, 0.0
        %vm720 = vcmp.gt.f32.partialorder %v558, 0.0
        %v721 = vsel %vm689, %v435, %v657
        %v722 = vsel %vm690, %v438, %v658
        %v723 = vsel %vm691, %v443, %v659
        %v724 = vsel %vm692, %v446, %v660
        %v725 = vsel %vm693, %v451, %v661
        %v726 = vsel %vm694, %v454, %v662
        %v727 = vsel %vm695, %v459, %v663
        %v728 = vsel %vm696, %v462, %v664
        %v729 = vsel %vm697, %v467, %v665
        %v730 = vsel %vm698, %v470, %v666
        %v731 = vsel %vm699, %v475, %v667
        %v732 = vsel %vm700, %v478, %v668
        %v733 = vsel %vm701, %v483, %v669
        %v734 = vsel %vm702, %v486, %v670
        %v735 = vsel %vm703, %v491, %v671
        %v736 = vsel %vm704, %v494, %v672
        %v737 = vsel %vm705, %v499, %v673
        %v738 = vsel %vm706, %v502, %v674
        %v739 = vsel %vm707, %v507, %v675
        %v740 = vsel %vm708, %v510, %v676
        %v741 = vsel %vm709, %v515, %v677
        %v742 = vsel %vm710, %v518, %v678
        %v743 = vsel %vm711, %v523, %v679
        %v744 = vsel %vm712, %v526, %v680
        %v745 = vsel %vm713, %v531, %v681
        %v746 = vsel %vm714, %v534, %v682
        %v747 = vsel %vm715, %v539, %v683
        %v748 = vsel %vm716, %v542, %v684
        %v749 = vsel %vm717, %v547, %v685
        %v750 = vsel %vm718, %v550, %v686
        %v751 = vsel %vm719, %v555, %v687
        %v752 = vsel %vm720, %v558, %v688
        %753 = vst [vmem:[%s164] sm:$0xff] %v721
        %754 = vst [vmem:[%s164 + $0x8] sm:$0xff] %v722
        %755 = vst [vmem:[%s164 + $0x10] sm:$0xff] %v723
        %756 = vst [vmem:[%s164 + $0x18] sm:$0xff] %v724
        %757 = vst [vmem:[%s164 + $0x20] sm:$0xff] %v725
        %758 = vst [vmem:[%s164 + $0x28] sm:$0xff] %v726
        %759 = vst [vmem:[%s164 + $0x30] sm:$0xff] %v727
        %760 = vst [vmem:[%s164 + $0x38] sm:$0xff] %v728
        %761 = vst [vmem:[%s164 + $0x40] sm:$0xff] %v729
        %762 = vst [vmem:[%s164 + $0x48] sm:$0xff] %v730
        %763 = vst [vmem:[%s164 + $0x50] sm:$0xff] %v731
        %764 = vst [vmem:[%s164 + $0x58] sm:$0xff] %v732
        %765 = vst [vmem:[%s164 + $0x60] sm:$0xff] %v733
        %766 = vst [vmem:[%s164 + $0x68] sm:$0xff] %v734
        %767 = vst [vmem:[%s164 + $0x70] sm:$0xff] %v735
        %768 = vst [vmem:[%s164 + $0x78] sm:$0xff] %v736
        %769 = vst [vmem:[%s164 + $0x80] sm:$0xff] %v737
        %770 = vst [vmem:[%s164 + $0x88] sm:$0xff] %v738
        %771 = vst [vmem:[%s164 + $0x90] sm:$0xff] %v739
        %772 = vst [vmem:[%s164 + $0x98] sm:$0xff] %v740
        %773 = vst [vmem:[%s164 + $0xa0] sm:$0xff] %v741
        %774 = vst [vmem:[%s164 + $0xa8] sm:$0xff] %v742
        %775 = vst [vmem:[%s164 + $0xb0] sm:$0xff] %v743
        %776 = vst [vmem:[%s164 + $0xb8] sm:$0xff] %v744
        %777 = vst [vmem:[%s164 + $0xc0] sm:$0xff] %v745
        %778 = vst [vmem:[%s164 + $0xc8] sm:$0xff] %v746
        %779 = vst [vmem:[%s164 + $0xd0] sm:$0xff] %v747
        %780 = vst [vmem:[%s164 + $0xd8] sm:$0xff] %v748
        %781 = vst [vmem:[%s164 + $0xe0] sm:$0xff] %v749
        %782 = vst [vmem:[%s164 + $0xe8] sm:$0xff] %v750
        %783 = vst [vmem:[%s164 + $0xf0] sm:$0xff] %v751
        %784 = vst [vmem:[%s164 + $0xf8] sm:$0xff] %v752
        %s785 = sand.u32 %s93, 1
        %s786 = scalar_lea.sflag [#allocation3], %s785
        %s787 = sand.u32 %s93, 1
        %s788 = smul.addr %s787, 256
        %s789 = scalar_lea.vmem [#allocation2], %s788
        // Predicated region
        $region33: #{tpu_custom_call.1} parent=31 // pred_check
          %p790 = pneg %p103
        $region34: #{tpu_custom_call.1} parent=31 // pred_check_branch
          %792 = sbr.rel (%p790) target = $region36
        $region35: #{tpu_custom_call.1} parent=31 // pred_region
          %s793 = smul.u32 32, %s17
          %s795 = ssub.s32 4096, 4096
          %796 = vsyncadd %s786, %s795
          %s797 = smul.addr %s793, 128
          %s798 = scalar_lea.hbm %s3, %s797
          %s799 = sshll.u32 %s789, 4
          %s800 = int_to_ptr.vmem [resolvable:$true] %s799
          %805 = dma.vmem_to_hbm [thread:$0]  %s800, 4096, %s798, %s786, 128, 128, 8
        $region36: #{tpu_custom_call.1} parent=31 // pred_fallthru
          _
      $region32: #{tpu_custom_call.1} parent=5 // pred_fallthru
        _
      %p806 = scmp.le.s32.totalorder 2, %s12
      // Predicated region
      $region37: #{tpu_custom_call.1} parent=5 // pred_check
        %p807 = pneg %p806
      $region38: #{tpu_custom_call.1} parent=5 // pred_check_branch
        %809 = sbr.rel (%p807) target = $region40
      $region39: #{tpu_custom_call.1} parent=5 // pred_region
        %s810 = ssub.s32 %s12, 2
        // Predicated region
        $region41: #{tpu_custom_call.1} parent=39 // pred_check
          %p811 = pneg %p109
        $region42: #{tpu_custom_call.1} parent=39 // pred_check_branch
          %813 = sbr.rel (%p811) target = $region44
        $region43: #{tpu_custom_call.1} parent=39 // pred_region
          %s814 = sand.u32 %s94, 1
          %s815 = scalar_lea.sflag [#allocation3], %s814
          %s816 = sand.u32 %s94, 1
          %s817 = smul.addr %s816, 256
          %s818 = scalar_lea.vmem [#allocation2], %s817
          %819 = dma.done %s815, 4096
        $region44: #{tpu_custom_call.1} parent=39 // pred_fallthru
          _
      $region40: #{tpu_custom_call.1} parent=5 // pred_fallthru
        _
    $region6: #{tpu_custom_call.1} parent=1 // loop_footer
      %s16 = sadd.s32 1, %s12
    $region7: #{tpu_custom_call.1} parent=1 // loop_footer_branch
      %11 = sbr.rel target = $region3
    $region8: #{tpu_custom_call.1} parent=1 // loop_exit
      _
    %820 = vsyncpa [#allocation3], 1
    %s821 = scalar_lea.sflag [#allocation3], 1
    %822 = vsyncpa %s821, 1

</llo_original>
